<compile_context>
chip_gen: v7x
topology: tpu7x:2x2x1
jax: 0.10.0
libtpu: 0.0.40
codegen_flags: <defaults>
</compile_context>

<pallas_src>
import jax
import jax.numpy as jnp
from jax.experimental import pallas as pl
from jax.experimental.pallas import tpu as pltpu

LANE = 128


def _round_up(v, m):
    return ((v + m - 1) // m) * m


# ---------------------------------------------------------------------------
# Kernel A: transposed conv-GEMM + per-channel sum / sum-of-squares
# ---------------------------------------------------------------------------
def conv_stats_kernel(xT_ref, w_ref, y_ref, ssum_ref, ssq_ref):
    i = pl.program_id(1)                     # pixel-tile index within this core

    @pl.when(i == 0)
    def _init():
        ssum_ref[...] = jnp.zeros_like(ssum_ref)
        ssq_ref[...] = jnp.zeros_like(ssq_ref)

    # MXU: (C_out, Kdim) @ (Kdim, tm) -> (C_out, tm), f32 accumulation.
    y = jnp.dot(w_ref[...], xT_ref[...], preferred_element_type=jnp.float32)

    # Pre-BN activations streamed back in bf16 (halves the y round trip).
    y_ref[...] = y.astype(y_ref.dtype)

    # Batch statistics in f32.  Padded pixel columns of x_col^T are exactly
    # zero and no bias is added, so they contribute 0 to both sums -> no
    # validity masking required on any tile.
    ssum_ref[0] += jnp.sum(y, axis=1, keepdims=True)       # (C_out, 1)
    ssq_ref[0] += jnp.sum(y * y, axis=1, keepdims=True)    # (C_out, 1)


# ---------------------------------------------------------------------------
# Kernel B: y * scale + shift, ReLU  (scale/shift precomputed in the wrapper)
# ---------------------------------------------------------------------------
def bn_relu_kernel(y_ref, scale_ref, shift_ref, o_ref):
    y = y_ref[...].astype(jnp.float32)                     # f32 math (v5e VPU)
    o_ref[...] = jnp.maximum(y * scale_ref[...] + shift_ref[...], 0.0)


# ---------------------------------------------------------------------------
# Wrapper
# ---------------------------------------------------------------------------
def conv_block_forward(x_nchw, conv_w, conv_b, gamma, beta, *, tm=1024,
                       eps=1e-5):
    """x_nchw: (N, C_in, H, W) f32.  conv_w: (C_out, C_in, K, K) PyTorch OIHW.

    Supports the module defaults: stride=1, dilation=1, padding=(K-1)//2.
    `conv_b` is accepted for interface parity but is mathematically redundant
    before training-mode BatchNorm (it cancels exactly) and is not used.
    """
    del conv_b                                             # see note above
    N, C_in, H, W = x_nchw.shape
    C_out, c_in_w, Kh, Kw = conv_w.shape
    assert c_in_w == C_in
    pad = (Kh - 1) // 2

    M = N * H * W
    Kdim = Kh * Kw * C_in

    # ---- tiling: pixels on lanes, split across (up to) 2 TensorCores ----
    n_split = 2 if M >= 2 * LANE else 1
    m_per_core = _round_up(pl.cdiv(M, n_split), LANE)
    tm = max(LANE, min(_round_up(tm, LANE), m_per_core))

    def step_bytes(t):
        # double-buffered per-step footprint of the heavier phase
        a = (2 * Kdim * t * 2            # x_col^T tile (bf16)
             + 2 * C_out * Kdim * 2      # resident weights (bf16)
             + 2 * C_out * t * 2         # y tile (bf16)
             + 4 * C_out * 4)            # stats slabs
        b = (2 * C_out * t * 2           # y tile (bf16)
             + 2 * C_out * t * 4         # output tile (f32)
             + 4 * C_out * 4)            # scale / shift
        return max(a, b)

    while step_bytes(tm) > 40 * 1024 * 1024 and tm > LANE:
        tm = max(LANE, tm // 2)

    grid_m = pl.cdiv(m_per_core, tm)
    m_per_core = grid_m * tm
    Mp = n_split * m_per_core
    # Tile-derived VMEM budget, capped for v7x's 64 MiB physical VMEM.
    vmem_limit = int(min(max(step_bytes(tm) + 16 * 2**20, 32 * 2**20),
                         56 * 2**20))

    # ---- glue: transposed im2col (bf16; no Kdim/C_out zero padding) ----
    x_bf = x_nchw.astype(jnp.bfloat16)
    x_sp = jnp.pad(x_bf, ((0, 0), (0, 0), (pad, pad), (pad, pad)))
    taps = [x_sp[:, :, ky:ky + H, kx:kx + W]
            for ky in range(Kh) for kx in range(Kw)]       # (N, C_in, H, W) each
    x_colT = jnp.stack(taps, axis=0)                       # (Kh*Kw, N, C_in, H, W)
    x_colT = jnp.transpose(x_colT, (0, 2, 1, 3, 4)).reshape(Kdim, M)
    x_colT = jnp.pad(x_colT, ((0, 0), (0, Mp - M)))        # zero pixel padding

    # weights flattened in matching (ky, kx, ci) order
    w_colT = jnp.transpose(conv_w, (0, 2, 3, 1)).reshape(C_out, Kdim)
    w_colT = w_colT.astype(jnp.bfloat16)

    # ---- phase A: streaming GEMM + batch-stat accumulation ----
    cost_a = pl.CostEstimate(
        flops=2 * C_out * Kdim * Mp,
        transcendentals=0,
        bytes_accessed=(Kdim * Mp * 2 + C_out * Kdim * 2
                        + C_out * Mp * 2 + 2 * n_split * C_out * 4),
    )
    y_bf, ssum_p, ssq_p = pl.pallas_call(
        conv_stats_kernel,
        out_shape=(
            jax.ShapeDtypeStruct((C_out, Mp), jnp.bfloat16),   # pre-BN y^T
            jax.ShapeDtypeStruct((n_split, C_out, 1), jnp.float32),
            jax.ShapeDtypeStruct((n_split, C_out, 1), jnp.float32),
        ),
        grid=(n_split, grid_m),
        in_specs=[
            pl.BlockSpec((Kdim, tm), lambda c, i: (0, c * grid_m + i)),
            pl.BlockSpec((C_out, Kdim), lambda c, i: (0, 0)),  # resident weights
        ],
        out_specs=(
            pl.BlockSpec((C_out, tm), lambda c, i: (0, c * grid_m + i)),
            pl.BlockSpec((1, C_out, 1), lambda c, i: (c, 0, 0)),  # per-core stats
            pl.BlockSpec((1, C_out, 1), lambda c, i: (c, 0, 0)),
        ),
        compiler_params=pltpu.CompilerParams(
            dimension_semantics=("parallel", "arbitrary"),
            vmem_limit_bytes=vmem_limit,
        ),
        cost_estimate=cost_a,
    )(x_colT, w_colT)

    # ---- tiny wrapper math: reduce partials, fold BN into scale/shift ----
    ssum = jnp.sum(ssum_p[:, :, 0], axis=0)                # (C_out,)
    ssq = jnp.sum(ssq_p[:, :, 0], axis=0)
    mean = ssum / M
    var = jnp.maximum(ssq / M - mean * mean, 0.0)
    scale = gamma.astype(jnp.float32) * jax.lax.rsqrt(var + eps)
    shift = beta.astype(jnp.float32) - mean * scale
    scale_col = scale.reshape(C_out, 1)
    shift_col = shift.reshape(C_out, 1)

    # ---- phase B: fused affine + ReLU (one FMA + max per element) ----
    n_tiles = n_split * grid_m
    cost_b = pl.CostEstimate(
        flops=3 * C_out * Mp,
        transcendentals=0,
        bytes_accessed=C_out * Mp * 2 + C_out * Mp * 4 + 2 * C_out * 4,
    )
    out_cm = pl.pallas_call(
        bn_relu_kernel,
        out_shape=jax.ShapeDtypeStruct((C_out, Mp), jnp.float32),
        grid=(n_tiles,),
        in_specs=[
            pl.BlockSpec((C_out, tm), lambda i: (0, i)),
            pl.BlockSpec((C_out, 1), lambda i: (0, 0)),
            pl.BlockSpec((C_out, 1), lambda i: (0, 0)),
        ],
        out_specs=pl.BlockSpec((C_out, tm), lambda i: (0, i)),
        compiler_params=pltpu.CompilerParams(
            dimension_semantics=("parallel",),
            vmem_limit_bytes=vmem_limit,
        ),
        cost_estimate=cost_b,
    )(y_bf, scale_col, shift_col)

    out = out_cm[:, :M].reshape(C_out, N, H, W)
    return jnp.transpose(out, (1, 0, 2, 3))                # back to NCHW


# ---------------------------------------------------------------------------
# Reference (plain JAX)
# ---------------------------------------------------------------------------
def reference_forward(x, conv_w, conv_b, gamma, beta, *,
                      matmul_dtype=jnp.float32, round_intermediate=False):
    y = jax.lax.conv_general_dilated(
        x.astype(matmul_dtype), conv_w.astype(matmul_dtype),
        window_strides=(1, 1), padding=((1, 1), (1, 1)),
        dimension_numbers=("NCHW", "OIHW", "NCHW"),
        preferred_element_type=jnp.float32)
    y = y + conv_b.reshape(1, -1, 1, 1)
    mean = jnp.mean(y, axis=(0, 2, 3), keepdims=True)
    var = jnp.mean((y - mean) ** 2, axis=(0, 2, 3), keepdims=True)
    if round_intermediate:                                 # model bf16 y store
        y = y.astype(jnp.bfloat16).astype(jnp.float32)
    y = (y - mean) * jax.lax.rsqrt(var + 1e-5)
    y = y * gamma.reshape(1, -1, 1, 1) + beta.reshape(1, -1, 1, 1)
    return jnp.maximum(y, 0.0)


if __name__ == "__main__":
    key = jax.random.PRNGKey(0)
    k1, k2, k3, k4, k5 = jax.random.split(key, 5)

    N, C_in, H, W = 2, 4, 16, 16
    C_out, K = 8, 3

    x = jax.random.normal(k1, (N, C_in, H, W), jnp.float32)
    conv_w = 0.1 * jax.random.normal(k2, (C_out, C_in, K, K), jnp.float32)
    conv_b = 0.1 * jax.random.normal(k3, (C_out,), jnp.float32)
    gamma = 1.0 + 0.1 * jax.random.normal(k4, (C_out,), jnp.float32)  # BN weight
    beta = 0.05 * jax.random.normal(k5, (C_out,), jnp.float32)        # BN bias

    fwd = jax.jit(conv_block_forward)
    out = jax.block_until_ready(fwd(x, conv_w, conv_b, gamma, beta))
    assert out.shape == (N, C_out, H, W)

    # Check 1: reference modeling the kernel's precision (bf16 MXU operands,
    # bf16 pre-BN intermediate).  Bias is passed as zero because the kernel
    # provably drops it (it cancels exactly under training-mode BN); the
    # reference output is mathematically identical either way.  Tolerance
    # covers ~1 bf16 ulp of the intermediate times the BN scale.
    ref_bf16 = reference_forward(x, conv_w, jnp.zeros_like(conv_b), gamma, beta,
                                 matmul_dtype=jnp.bfloat16,
                                 round_intermediate=True)
    err = float(jnp.max(jnp.abs(out - ref_bf16)))
    assert jnp.allclose(out, ref_bf16, atol=3e-2, rtol=3e-2), err

    # Check 2: loose semantic check against the pure-f32 PyTorch-equivalent
    # math (difference is only the bf16 rounding of operands / intermediate).
    ref_f32 = reference_forward(x, conv_w, conv_b, gamma, beta,
                                matmul_dtype=jnp.float32)
    err32 = float(jnp.max(jnp.abs(out - ref_f32)))
    assert jnp.allclose(out, ref_f32, atol=1e-1, rtol=1e-1), err32

    print("KERNEL_OK")
</pallas_src>

<mosaic_0001>
module attributes {stable_mosaic.version = 11 : i64} {
  func.func @conv_stats_kernel(%arg0: i32, %arg1: i32, %arg2: memref<36x256xbf16, #tpu.memory_space<vmem>>, %arg3: memref<8x36xbf16, #tpu.memory_space<vmem>>, %arg4: memref<8x256xbf16, #tpu.memory_space<vmem>>, %arg5: memref<1x8x1xf32, #tpu.memory_space<vmem>>, %arg6: memref<1x8x1xf32, #tpu.memory_space<vmem>>) attributes {dimension_semantics = [#tpu.dimension_semantics<parallel>, #tpu.dimension_semantics<arbitrary>], iteration_bounds = array<i64: 2, 1>, scalar_prefetch = 0 : i64, scratch_operands = 0 : i64, tpu.core_type = #tpu.core_type<tc>, window_params = [{transform_indices = @transform_0, window_bounds = array<i64: 36, 256>}, {pipeline_mode = #tpu.pipeline_mode<synchronous>, transform_indices = @transform_1, window_bounds = array<i64: 8, 36>}, {transform_indices = @transform_2, window_bounds = array<i64: 8, 256>}, {transform_indices = @transform_3, window_bounds = array<i64: 1, 8, 1>}, {transform_indices = @transform_4, window_bounds = array<i64: 1, 8, 1>}]} {
    %c0_i32 = arith.constant 0 : i32
    %0 = arith.cmpi eq, %arg1, %c0_i32 : i32
    %1 = arith.extui %0 : i1 to i32
    %c0_i32_0 = arith.constant 0 : i32
    %2 = arith.cmpi ne, %1, %c0_i32_0 : i32
    scf.if %2 {
      %cst_20 = arith.constant 0.000000e+00 : f32
      %25 = vector.broadcast %cst_20 : f32 to vector<1x8x1xf32>
      %c0_21 = arith.constant 0 : index
      %c0_22 = arith.constant 0 : index
      %c0_23 = arith.constant 0 : index
      %26 = vector.load %arg5[%c0_21, %c0_22, %c0_23] : memref<1x8x1xf32, #tpu.memory_space<vmem>>, vector<1x8x1xf32>
      tpu.vector_store %arg5[%c0_21, %c0_22, %c0_23], %25 {strides = array<i32>} : memref<1x8x1xf32, #tpu.memory_space<vmem>>, vector<1x8x1xf32>,
      %cst_24 = arith.constant 0.000000e+00 : f32
      %27 = vector.broadcast %cst_24 : f32 to vector<1x8x1xf32>
      %c0_25 = arith.constant 0 : index
      %c0_26 = arith.constant 0 : index
      %c0_27 = arith.constant 0 : index
      %28 = vector.load %arg6[%c0_25, %c0_26, %c0_27] : memref<1x8x1xf32, #tpu.memory_space<vmem>>, vector<1x8x1xf32>
      tpu.vector_store %arg6[%c0_25, %c0_26, %c0_27], %27 {strides = array<i32>} : memref<1x8x1xf32, #tpu.memory_space<vmem>>, vector<1x8x1xf32>,
    } else {
    }
    %c0 = arith.constant 0 : index
    %c0_1 = arith.constant 0 : index
    %3 = vector.load %arg3[%c0, %c0_1] : memref<8x36xbf16, #tpu.memory_space<vmem>>, vector<8x36xbf16>
    %c0_2 = arith.constant 0 : index
    %c0_3 = arith.constant 0 : index
    %4 = vector.load %arg2[%c0_2, %c0_3] : memref<36x256xbf16, #tpu.memory_space<vmem>>, vector<36x256xbf16>
    %cst = arith.constant dense<0.000000e+00> : vector<8x256xf32>
    %5 = tpu.matmul %3, %4, %cst {dimension_numbers = #tpu.dot_dimension_numbers<[1], [0], [0], [1], [0, 0, 1, 1], [], []>} : vector<8x36xbf16>, vector<36x256xbf16>, vector<8x256xf32> -> vector<8x256xf32>
    %6 = arith.truncf %5 : vector<8x256xf32> to vector<8x256xbf16>
    %c0_4 = arith.constant 0 : index
    %c0_5 = arith.constant 0 : index
    %7 = vector.load %arg4[%c0_4, %c0_5] : memref<8x256xbf16, #tpu.memory_space<vmem>>, vector<8x256xbf16>
    tpu.vector_store %arg4[%c0_4, %c0_5], %6 {strides = array<i32>} : memref<8x256xbf16, #tpu.memory_space<vmem>>, vector<8x256xbf16>,
    %c0_6 = arith.constant 0 : index
    %c0_7 = arith.constant 0 : index
    %c0_8 = arith.constant 0 : index
    %8 = vector.load %arg5[%c0_6, %c0_7, %c0_8] : memref<1x8x1xf32, #tpu.memory_space<vmem>>, vector<1x8x1xf32>
    %9 = vector.shape_cast %8 : vector<1x8x1xf32> to vector<8x1xf32>
    %cst_9 = arith.constant dense<0.000000e+00> : vector<8xf32>
    %10 = vector.multi_reduction <add>, %5, %cst_9 [1] : vector<8x256xf32> to vector<8xf32>
    %11 = vector.shape_cast %10 : vector<8xf32> to vector<8x1xf32>
    %12 = arith.addf %9, %11 : vector<8x1xf32>
    %c0_10 = arith.constant 0 : index
    %c0_11 = arith.constant 0 : index
    %c0_12 = arith.constant 0 : index
    %13 = vector.load %arg5[%c0_10, %c0_11, %c0_12] : memref<1x8x1xf32, #tpu.memory_space<vmem>>, vector<1x8x1xf32>
    %14 = vector.shape_cast %13 : vector<1x8x1xf32> to vector<8x1xf32>
    %15 = vector.shape_cast %12 : vector<8x1xf32> to vector<1x8x1xf32>
    tpu.vector_store %arg5[%c0_10, %c0_11, %c0_12], %15 {strides = array<i32>} : memref<1x8x1xf32, #tpu.memory_space<vmem>>, vector<1x8x1xf32>,
    %c0_13 = arith.constant 0 : index
    %c0_14 = arith.constant 0 : index
    %c0_15 = arith.constant 0 : index
    %16 = vector.load %arg6[%c0_13, %c0_14, %c0_15] : memref<1x8x1xf32, #tpu.memory_space<vmem>>, vector<1x8x1xf32>
    %17 = vector.shape_cast %16 : vector<1x8x1xf32> to vector<8x1xf32>
    %18 = arith.mulf %5, %5 : vector<8x256xf32>
    %cst_16 = arith.constant dense<0.000000e+00> : vector<8xf32>
    %19 = vector.multi_reduction <add>, %18, %cst_16 [1] : vector<8x256xf32> to vector<8xf32>
    %20 = vector.shape_cast %19 : vector<8xf32> to vector<8x1xf32>
    %21 = arith.addf %17, %20 : vector<8x1xf32>
    %c0_17 = arith.constant 0 : index
    %c0_18 = arith.constant 0 : index
    %c0_19 = arith.constant 0 : index
    %22 = vector.load %arg6[%c0_17, %c0_18, %c0_19] : memref<1x8x1xf32, #tpu.memory_space<vmem>>, vector<1x8x1xf32>
    %23 = vector.shape_cast %22 : vector<1x8x1xf32> to vector<8x1xf32>
    %24 = vector.shape_cast %21 : vector<8x1xf32> to vector<1x8x1xf32>
    tpu.vector_store %arg6[%c0_17, %c0_18, %c0_19], %24 {strides = array<i32>} : memref<1x8x1xf32, #tpu.memory_space<vmem>>, vector<1x8x1xf32>,
    return
  }
  func.func @transform_0(%arg0: i32, %arg1: i32) -> (i32, i32) {
    %c1_i32 = arith.constant 1 : i32
    %0 = arith.muli %arg0, %c1_i32 : i32
    %1 = arith.addi %0, %arg1 : i32
    %c0_i32 = arith.constant 0 : i32
    %c0_i32_0 = arith.constant 0 : i32
    return %c0_i32, %1 : i32, i32
  }
  func.func @transform_1(%arg0: i32, %arg1: i32) -> (i32, i32) {
    %c0_i32 = arith.constant 0 : i32
    %c0_i32_0 = arith.constant 0 : i32
    %c0_i32_1 = arith.constant 0 : i32
    return %c0_i32, %c0_i32_0 : i32, i32
  }
  func.func @transform_2(%arg0: i32, %arg1: i32) -> (i32, i32) {
    %c1_i32 = arith.constant 1 : i32
    %0 = arith.muli %arg0, %c1_i32 : i32
    %1 = arith.addi %0, %arg1 : i32
    %c0_i32 = arith.constant 0 : i32
    %c0_i32_0 = arith.constant 0 : i32
    return %c0_i32, %1 : i32, i32
  }
  func.func @transform_3(%arg0: i32, %arg1: i32) -> (i32, i32, i32) {
    %c0_i32 = arith.constant 0 : i32
    %c0_i32_0 = arith.constant 0 : i32
    %c0_i32_1 = arith.constant 0 : i32
    return %arg0, %c0_i32, %c0_i32_0 : i32, i32, i32
  }
  func.func @transform_4(%arg0: i32, %arg1: i32) -> (i32, i32, i32) {
    %c0_i32 = arith.constant 0 : i32
    %c0_i32_0 = arith.constant 0 : i32
    %c0_i32_1 = arith.constant 0 : i32
    return %arg0, %c0_i32, %c0_i32_0 : i32, i32, i32
  }
}

module attributes {stable_mosaic.version = 11 : i64} {
  func.func @bn_relu_kernel(%arg0: i32, %arg1: memref<8x256xbf16, #tpu.memory_space<vmem>>, %arg2: memref<8x1xf32, #tpu.memory_space<vmem>>, %arg3: memref<8x1xf32, #tpu.memory_space<vmem>>, %arg4: memref<8x256xf32, #tpu.memory_space<vmem>>) attributes {dimension_semantics = [#tpu.dimension_semantics<parallel>], iteration_bounds = array<i64: 2>, scalar_prefetch = 0 : i64, scratch_operands = 0 : i64, tpu.core_type = #tpu.core_type<tc>, window_params = [{transform_indices = @transform_0, window_bounds = array<i64: 8, 256>}, {pipeline_mode = #tpu.pipeline_mode<synchronous>, transform_indices = @transform_1, window_bounds = array<i64: 8, 1>}, {pipeline_mode = #tpu.pipeline_mode<synchronous>, transform_indices = @transform_2, window_bounds = array<i64: 8, 1>}, {transform_indices = @transform_3, window_bounds = array<i64: 8, 256>}]} {
    %c0 = arith.constant 0 : index
    %c0_0 = arith.constant 0 : index
    %0 = vector.load %arg1[%c0, %c0_0] : memref<8x256xbf16, #tpu.memory_space<vmem>>, vector<8x256xbf16>
    %1 = arith.extf %0 : vector<8x256xbf16> to vector<8x256xf32>
    %c0_1 = arith.constant 0 : index
    %c0_2 = arith.constant 0 : index
    %2 = vector.load %arg2[%c0_1, %c0_2] : memref<8x1xf32, #tpu.memory_space<vmem>>, vector<8x1xf32>
    %3 = vector.broadcast %2 : vector<8x1xf32> to vector<8x256xf32>
    %4 = arith.mulf %1, %3 : vector<8x256xf32>
    %c0_3 = arith.constant 0 : index
    %c0_4 = arith.constant 0 : index
    %5 = vector.load %arg3[%c0_3, %c0_4] : memref<8x1xf32, #tpu.memory_space<vmem>>, vector<8x1xf32>
    %6 = vector.broadcast %5 : vector<8x1xf32> to vector<8x256xf32>
    %7 = arith.addf %4, %6 : vector<8x256xf32>
    %cst = arith.constant 0.000000e+00 : f32
    %8 = vector.broadcast %cst : f32 to vector<8x256xf32>
    %9 = arith.maximumf %7, %8 : vector<8x256xf32>
    %c0_5 = arith.constant 0 : index
    %c0_6 = arith.constant 0 : index
    %10 = vector.load %arg4[%c0_5, %c0_6] : memref<8x256xf32, #tpu.memory_space<vmem>>, vector<8x256xf32>
    tpu.vector_store %arg4[%c0_5, %c0_6], %9 {strides = array<i32>} : memref<8x256xf32, #tpu.memory_space<vmem>>, vector<8x256xf32>,
    return
  }
  func.func @transform_0(%arg0: i32) -> (i32, i32) {
    %c0_i32 = arith.constant 0 : i32
    %c0_i32_0 = arith.constant 0 : i32
    return %c0_i32, %arg0 : i32, i32
  }
  func.func @transform_1(%arg0: i32) -> (i32, i32) {
    %c0_i32 = arith.constant 0 : i32
    %c0_i32_0 = arith.constant 0 : i32
    %c0_i32_1 = arith.constant 0 : i32
    return %c0_i32, %c0_i32_0 : i32, i32
  }
  func.func @transform_2(%arg0: i32) -> (i32, i32) {
    %c0_i32 = arith.constant 0 : i32
    %c0_i32_0 = arith.constant 0 : i32
    %c0_i32_1 = arith.constant 0 : i32
    return %c0_i32, %c0_i32_0 : i32, i32
  }
  func.func @transform_3(%arg0: i32) -> (i32, i32) {
    %c0_i32 = arith.constant 0 : i32
    %c0_i32_0 = arith.constant 0 : i32
    return %c0_i32, %arg0 : i32, i32
  }
}

</mosaic_0001>

<llo_original>
// kernel: conv_block_forward.3
$region0: #{conv_block_forward.3}
  #allocation0 [shape = 'u32[]', space=smem, size = 0x4, offset = 0x4, fixed_abs, tag = 'smem constant byte address 0x4 - core index']
  #allocation1 [shape = 'u32[144,128]{1,0:T(1,128)}', space=vmem, size = 0x12000, scoped, tag = 'internal scratch']
  %s0 = inlined_call_operand.vmem [shape: bf16[8,512], index: 0, kind: input, shape index: {}]
  %s1 = inlined_call_operand.vmem [shape: f32[8,1], index: 1, kind: input, shape index: {}]
  %s2 = inlined_call_operand.vmem [shape: f32[8,1], index: 2, kind: input, shape index: {}]
  %s3 = inlined_call_operand.vmem [shape: f32[8,512], index: 3, kind: output, shape index: {}]
  %s4 = sld [smem:[#allocation0]]
  $region45: #{conv_block_forward.3} parent=0
    _
  %s6 = ssub.s32 1, %s4
  %s7 = scalar_select 0, %s6, %s4
  loop: start=0, step=1, limit=4
  $region2: #{conv_block_forward.3} parent=0 // loop_pre_header
    _
  $region3: #{conv_block_forward.3} parent=0 // loop_header
    %s9 = sphi 0, %s13
    %p10 = scmp.ge.s32.totalorder %s9, 4
    %s19 = sphi 0, %s21
    %s22 = sphi 0, %s19
    %s23 = sphi 0, %s22
    %s39 = sphi 0, %s23
    %s43 = sphi 0, %s43
    %s45 = sphi 0, %s43
    %s46 = sphi 0, %s45
    %s60 = sphi 0, %s46
    %s64 = sphi 0, %s64
    %s66 = sphi 0, %s64
    %s67 = sphi 0, %s66
    %s81 = sphi 0, %s67
    %s87 = sphi 0, %s89
    %s90 = sphi 0, %s87
    %s91 = sphi 0, %s90
    %s107 = sphi 0, %s91
  $region4: #{conv_block_forward.3} parent=0 // loop_header_branch
    %12 = sbr.rel (%p10) target = $region8
  $region5: #{conv_block_forward.3} parent=0 // loop_body
    %s14 = ssub.s32 %s9, 1
    %s15 = ssub.s32 %s9, 2
    %s16 = sadd.s32 %s9, 1
    %s17 = ssub.s32 %s9, %s16
    %p18 = scmp.eq.s32.totalorder %s17, 0
    %s20 = sadd.s32 %s19, 1
    %s21 = scalar_select %p18, %s19, %s20
    %p24 = pneg %p18
    %p25 = scmp.eq.s32.totalorder %s9, 1
    %p26 = por %p24, %p25
    %p27 = scmp.ne.s32.totalorder %s19, %s22
    %p28 = scmp.eq.s32.totalorder %s9, 0
    %p29 = por %p27, %p28
    %p30 = scmp.ne.s32.totalorder %s19, %s22
    %p31 = scmp.eq.s32.totalorder %s14, 1
    %p32 = por %p30, %p31
    %p33 = scmp.ne.s32.totalorder %s22, %s23
    %p34 = scmp.eq.s32.totalorder %s14, 0
    %p35 = por %p33, %p34
    %p36 = scmp.ne.s32.totalorder %s22, %s23
    %p37 = scmp.eq.s32.totalorder %s15, 1
    %p38 = por %p36, %p37
    %p40 = scmp.ne.s32.totalorder %s23, %s39
    %p41 = scmp.eq.s32.totalorder %s15, 0
    %p42 = por %p40, %p41
    %s44 = sadd.s32 %s43, 1
    %p47 = scmp.eq.s32.totalorder %s9, 1
    %p48 = scmp.ne.s32.totalorder %s43, %s45
    %p49 = scmp.eq.s32.totalorder %s9, 0
    %p50 = por %p48, %p49
    %p51 = scmp.ne.s32.totalorder %s43, %s45
    %p52 = scmp.eq.s32.totalorder %s14, 1
    %p53 = por %p51, %p52
    %p54 = scmp.ne.s32.totalorder %s45, %s46
    %p55 = scmp.eq.s32.totalorder %s14, 0
    %p56 = por %p54, %p55
    %p57 = scmp.ne.s32.totalorder %s45, %s46
    %p58 = scmp.eq.s32.totalorder %s15, 1
    %p59 = por %p57, %p58
    %p61 = scmp.ne.s32.totalorder %s46, %s60
    %p62 = scmp.eq.s32.totalorder %s15, 0
    %p63 = por %p61, %p62
    %s65 = sadd.s32 %s64, 1
    %p68 = scmp.eq.s32.totalorder %s9, 1
    %p69 = scmp.ne.s32.totalorder %s64, %s66
    %p70 = scmp.eq.s32.totalorder %s9, 0
    %p71 = por %p69, %p70
    %p72 = scmp.ne.s32.totalorder %s64, %s66
    %p73 = scmp.eq.s32.totalorder %s14, 1
    %p74 = por %p72, %p73
    %p75 = scmp.ne.s32.totalorder %s66, %s67
    %p76 = scmp.eq.s32.totalorder %s14, 0
    %p77 = por %p75, %p76
    %p78 = scmp.ne.s32.totalorder %s66, %s67
    %p79 = scmp.eq.s32.totalorder %s15, 1
    %p80 = por %p78, %p79
    %p82 = scmp.ne.s32.totalorder %s67, %s81
    %p83 = scmp.eq.s32.totalorder %s15, 0
    %p84 = por %p82, %p83
    %s85 = ssub.s32 %s9, %s16
    %p86 = scmp.eq.s32.totalorder %s85, 0
    %s88 = sadd.s32 %s87, 1
    %s89 = scalar_select %p86, %s87, %s88
    %p92 = pneg %p86
    %p93 = scmp.eq.s32.totalorder %s9, 1
    %p94 = por %p92, %p93
    %p95 = scmp.ne.s32.totalorder %s87, %s90
    %p96 = scmp.eq.s32.totalorder %s9, 0
    %p97 = por %p95, %p96
    %p98 = scmp.ne.s32.totalorder %s87, %s90
    %p99 = scmp.eq.s32.totalorder %s14, 1
    %p100 = por %p98, %p99
    %p101 = scmp.ne.s32.totalorder %s90, %s91
    %p102 = scmp.eq.s32.totalorder %s14, 0
    %p103 = por %p101, %p102
    %p104 = scmp.ne.s32.totalorder %s90, %s91
    %p105 = scmp.eq.s32.totalorder %s15, 1
    %p106 = por %p104, %p105
    %p108 = scmp.ne.s32.totalorder %s91, %s107
    %p109 = scmp.eq.s32.totalorder %s15, 0
    %p110 = por %p108, %p109
    %p111 = scmp.le.s32.totalorder 1, %s9
    %p112 = scmp.lt.s32.totalorder %s9, 3
    %p113 = pnand %p111, %p112
    %p114 = pneg %p113
    // Predicated region
    $region9: #{conv_block_forward.3} parent=5 // pred_check
      _
    $region10: #{conv_block_forward.3} parent=5 // pred_check_branch
      %116 = sbr.rel (%p113) target = $region12
    $region11: #{conv_block_forward.3} parent=5 // pred_region
      %s117 = ssub.s32 %s9, 1
      // Predicated region
      $region13: #{conv_block_forward.3} parent=11 // pred_check
        %p118 = pneg %p56
      $region14: #{conv_block_forward.3} parent=11 // pred_check_branch
        %120 = sbr.rel (%p118) target = $region16
      $region15: #{conv_block_forward.3} parent=11 // pred_region
        _
      $region16: #{conv_block_forward.3} parent=11 // pred_fallthru
        _
      // Predicated region
      $region17: #{conv_block_forward.3} parent=11 // pred_check
        %p121 = pneg %p77
      $region18: #{conv_block_forward.3} parent=11 // pred_check_branch
        %123 = sbr.rel (%p121) target = $region20
      $region19: #{conv_block_forward.3} parent=11 // pred_region
        _
      $region20: #{conv_block_forward.3} parent=11 // pred_fallthru
        _
    $region12: #{conv_block_forward.3} parent=5 // pred_fallthru
      _
    %p124 = scmp.lt.s32.totalorder %s9, 2
    // Predicated region
    $region21: #{conv_block_forward.3} parent=5 // pred_check
      %p125 = pneg %p124
    $region22: #{conv_block_forward.3} parent=5 // pred_check_branch
      %127 = sbr.rel (%p125) target = $region24
    $region23: #{conv_block_forward.3} parent=5 // pred_region
      // Predicated region
      $region25: #{conv_block_forward.3} parent=23 // pred_check
        %p128 = pneg %p29
      $region26: #{conv_block_forward.3} parent=23 // pred_check_branch
        %130 = sbr.rel (%p128) target = $region28
      $region27: #{conv_block_forward.3} parent=23 // pred_region
        %s131 = smul.u32 2, %s9
        %p132 = scmp.lt.s32.totalorder %s131, 3
        %s133 = scalar_select %p132, %s131, 3
        %s134 = smul.addr %s133, 4
        %s135 = scalar_lea.vmem %s0, %s134
        %s136 = smul.u32 2, %s9
      $region28: #{conv_block_forward.3} parent=23 // pred_fallthru
        _
    $region24: #{conv_block_forward.3} parent=5 // pred_fallthru
      _
    %p137 = scmp.le.s32.totalorder 1, %s9
    %p138 = scmp.lt.s32.totalorder %s9, 3
    %p139 = pnand %p137, %p138
    %p140 = pneg %p139
    // Predicated region
    $region29: #{conv_block_forward.3} parent=5 // pred_check
      _
    $region30: #{conv_block_forward.3} parent=5 // pred_check_branch
      %142 = sbr.rel (%p139) target = $region32
    $region31: #{conv_block_forward.3} parent=5 // pred_region
      %s143 = ssub.s32 %s9, 1
      %s144 = smul.u32 2, %s14
      %p145 = scmp.lt.s32.totalorder %s144, 3
      %s146 = scalar_select %p145, %s144, 3
      %s147 = smul.addr %s146, 4
      %s148 = scalar_lea.vmem %s0, %s147
      %p149 = pneg %p35
      %p150 = pneg %p32
      %p151 = pneg %p56
      %p152 = pneg %p53
      %p153 = pneg %p77
      %p154 = pneg %p74
      %p155 = pneg %p103
      %p156 = pneg %p100
      %s157 = smul.u32 2, %s14
      %p158 = scmp.lt.s32.totalorder %s157, 3
      %s159 = scalar_select %p158, %s157, 3
      %s160 = smul.addr %s159, 8
      %s161 = scalar_lea.vmem %s3, %s160
      %s162 = smul.u32 2, %s14
      %p163 = scmp.lt.s32.totalorder %s162, 3
      %s164 = scalar_select %p163, %s162, 3
      %s165 = smul.addr %s164, 4
      %s166 = scalar_lea.vmem %s0, %s165
      %s167 = smul.u32 2, %s14
      %s168 = smul.u32 2, %s14
      %p169 = scmp.lt.s32.totalorder %s168, 3
      %s170 = scalar_select %p169, %s168, 3
      %s171 = smul.addr %s170, 8
      %s172 = scalar_lea.vmem %s3, %s171
      %s173 = smul.u32 2, %s14
      %v174 = vld [vmem:[%s166] sm:$0xff]
      %v175 = vunpack.c.l.bf16 %v174
      %v176 = vunpack.c.h.bf16 %v174
      %v177 = vld [vmem:[%s1] sm:$0xff]
      %179 = vset.pattern.permute.xlu0 0
      %180 = vperm.xlu0 %179, %v177
      %v181 = vpop.permute.xlu0 %180
      %v183 = vmul.f32 %v175, %v181
      %v184 = vmul.f32 %v176, %v181
      %v185 = vld [vmem:[%s2] sm:$0xff]
      %187 = vset.pattern.permute.xlu0 0
      %188 = vperm.xlu0 %187, %v185
      %v189 = vpop.permute.xlu0 %188
      %v191 = vadd.f32 %v183, %v189
      %v192 = vadd.f32 %v184, %v189
      %v193 = vmax.f32 %v191, 0.0
      %v194 = vmax.f32 %v192, 0.0
      %195 = vst [vmem:[%s172] sm:$0xff] %v193
      %196 = vst [vmem:[%s172 + $0x8] sm:$0xff] %v194
      %s197 = smul.u32 2, %s14
      %p198 = scmp.lt.s32.totalorder %s197, 3
      %s199 = scalar_select %p198, %s197, 3
      %s200 = smul.addr %s199, 8
      %s201 = scalar_lea.vmem %s3, %s200
      // Predicated region
      $region33: #{conv_block_forward.3} parent=31 // pred_check
        %p202 = pneg %p100
      $region34: #{conv_block_forward.3} parent=31 // pred_check_branch
        %204 = sbr.rel (%p202) target = $region36
      $region35: #{conv_block_forward.3} parent=31 // pred_region
        %s205 = smul.u32 2, %s14
      $region36: #{conv_block_forward.3} parent=31 // pred_fallthru
        _
    $region32: #{conv_block_forward.3} parent=5 // pred_fallthru
      _
    %p206 = scmp.le.s32.totalorder 2, %s9
    // Predicated region
    $region37: #{conv_block_forward.3} parent=5 // pred_check
      %p207 = pneg %p206
    $region38: #{conv_block_forward.3} parent=5 // pred_check_branch
      %209 = sbr.rel (%p207) target = $region40
    $region39: #{conv_block_forward.3} parent=5 // pred_region
      %s210 = ssub.s32 %s9, 2
      // Predicated region
      $region41: #{conv_block_forward.3} parent=39 // pred_check
        %p211 = pneg %p106
      $region42: #{conv_block_forward.3} parent=39 // pred_check_branch
        %213 = sbr.rel (%p211) target = $region44
      $region43: #{conv_block_forward.3} parent=39 // pred_region
        %s214 = smul.u32 2, %s15
        %p215 = scmp.lt.s32.totalorder %s214, 3
        %s216 = scalar_select %p215, %s214, 3
        %s217 = smul.addr %s216, 8
        %s218 = scalar_lea.vmem %s3, %s217
      $region44: #{conv_block_forward.3} parent=39 // pred_fallthru
        _
    $region40: #{conv_block_forward.3} parent=5 // pred_fallthru
      _
  $region6: #{conv_block_forward.3} parent=0 // loop_footer
    %s13 = sadd.s32 1, %s9
  $region7: #{conv_block_forward.3} parent=0 // loop_footer_branch
    %8 = sbr.rel target = $region3
  $region8: #{conv_block_forward.3} parent=0 // loop_exit
    _

// kernel: conv_block_forward.2
$region0: #{conv_block_forward.2}
  #allocation0 [shape = 'u32[]', space=smem, size = 0x4, offset = 0x4, fixed_abs, tag = 'smem constant byte address 0x4 - core index']
  #allocation1 [shape = 'u32[144,128]{1,0:T(1,128)}', space=vmem, size = 0x12000, scoped, tag = 'internal scratch']
  %s0 = inlined_call_operand.vmem [shape: bf16[36,512], index: 0, kind: input, shape index: {}]
  %s1 = inlined_call_operand.vmem [shape: bf16[8,36], index: 1, kind: input, shape index: {}]
  %s2 = inlined_call_operand.vmem [shape: bf16[8,512], index: 2, kind: output, shape index: {0}]
  %s3 = inlined_call_operand.vmem [shape: f32[2,8,1], index: 3, kind: output, shape index: {1}]
  %s4 = inlined_call_operand.vmem [shape: f32[2,8,1], index: 4, kind: output, shape index: {2}]
  %5 = xla_tuple %s2, %s3, %s4
  %s6 = sld [smem:[#allocation0]]
  $region99: #{conv_block_forward.2} parent=0
    _
  %s8 = ssub.s32 1, %s6
  %s9 = scalar_select 0, %s8, %s6
  $region1: #{conv_block_forward.2} parent=0
    #allocation2 [shape = 'u8[40960]{0}', space=vmem, size = 0xa000, scoped, tag = 'input window, operand 0']
    loop: start=0, step=1, limit=4
    $region2: #{conv_block_forward.2} parent=1 // loop_pre_header
      _
    $region3: #{conv_block_forward.2} parent=1 // loop_header
      %s11 = sphi 0, %s15
      %p12 = scmp.ge.s32.totalorder %s11, 4
      %s18 = sphi 0, %s30
      %s19 = sphi 0, %s26
      %s20 = sphi 0, %s18
      %s21 = sphi 0, %s19
      %s22 = sphi 0, %s20
      %s23 = sphi 0, %s21
      %s35 = sphi 0, %s37
      %s38 = sphi 0, %s35
      %s39 = sphi 0, %s38
      %s55 = sphi 0, %s39
      %s59 = sphi 0, %s59
      %s61 = sphi 0, %s59
      %s62 = sphi 0, %s61
      %s76 = sphi 0, %s62
      %s84 = sphi 0, %s86
      %s87 = sphi 0, %s84
      %s88 = sphi 0, %s87
      %s104 = sphi 0, %s88
      %s110 = sphi 0, %s112
      %s113 = sphi 0, %s110
      %s114 = sphi 0, %s113
      %s130 = sphi 0, %s114
      %s136 = sphi 0, %s138
      %s139 = sphi 0, %s136
      %s140 = sphi 0, %s139
      %s156 = sphi 0, %s140
    $region4: #{conv_block_forward.2} parent=1 // loop_header_branch
      %14 = sbr.rel (%p12) target = $region8
    $region5: #{conv_block_forward.2} parent=1 // loop_body
      %s16 = ssub.s32 %s11, 1
      %s17 = ssub.s32 %s11, 2
      %s24 = sadd.s32 1, %s19
      %p25 = scmp.ge.s32.totalorder %s24, 1
      %s26 = scalar_select %p25, 0, %s24
      %s27 = sadd.s32 1, %s18
      %s28 = scalar_select %p25, %s27, %s18
      %p29 = scmp.ge.s32.totalorder %s28, 2
      %s30 = scalar_select %p29, 0, %s28
      %s31 = sadd.s32 %s18, %s19
      %s32 = sadd.s32 %s30, %s26
      %s33 = ssub.s32 %s31, %s32
      %p34 = scmp.eq.s32.totalorder %s33, 0
      %s36 = sadd.s32 %s35, 1
      %s37 = scalar_select %p34, %s35, %s36
      %p40 = pneg %p34
      %p41 = scmp.eq.s32.totalorder %s11, 1
      %p42 = por %p40, %p41
      %p43 = scmp.ne.s32.totalorder %s35, %s38
      %p44 = scmp.eq.s32.totalorder %s11, 0
      %p45 = por %p43, %p44
      %p46 = scmp.ne.s32.totalorder %s35, %s38
      %p47 = scmp.eq.s32.totalorder %s16, 1
      %p48 = por %p46, %p47
      %p49 = scmp.ne.s32.totalorder %s38, %s39
      %p50 = scmp.eq.s32.totalorder %s16, 0
      %p51 = por %p49, %p50
      %p52 = scmp.ne.s32.totalorder %s38, %s39
      %p53 = scmp.eq.s32.totalorder %s17, 1
      %p54 = por %p52, %p53
      %p56 = scmp.ne.s32.totalorder %s39, %s55
      %p57 = scmp.eq.s32.totalorder %s17, 0
      %p58 = por %p56, %p57
      %s60 = sadd.s32 %s59, 1
      %p63 = scmp.eq.s32.totalorder %s11, 1
      %p64 = scmp.ne.s32.totalorder %s59, %s61
      %p65 = scmp.eq.s32.totalorder %s11, 0
      %p66 = por %p64, %p65
      %p67 = scmp.ne.s32.totalorder %s59, %s61
      %p68 = scmp.eq.s32.totalorder %s16, 1
      %p69 = por %p67, %p68
      %p70 = scmp.ne.s32.totalorder %s61, %s62
      %p71 = scmp.eq.s32.totalorder %s16, 0
      %p72 = por %p70, %p71
      %p73 = scmp.ne.s32.totalorder %s61, %s62
      %p74 = scmp.eq.s32.totalorder %s17, 1
      %p75 = por %p73, %p74
      %p77 = scmp.ne.s32.totalorder %s62, %s76
      %p78 = scmp.eq.s32.totalorder %s17, 0
      %p79 = por %p77, %p78
      %s80 = sadd.s32 %s18, %s19
      %s81 = sadd.s32 %s30, %s26
      %s82 = ssub.s32 %s80, %s81
      %p83 = scmp.eq.s32.totalorder %s82, 0
      %s85 = sadd.s32 %s84, 1
      %s86 = scalar_select %p83, %s84, %s85
      %p89 = pneg %p83
      %p90 = scmp.eq.s32.totalorder %s11, 1
      %p91 = por %p89, %p90
      %p92 = scmp.ne.s32.totalorder %s84, %s87
      %p93 = scmp.eq.s32.totalorder %s11, 0
      %p94 = por %p92, %p93
      %p95 = scmp.ne.s32.totalorder %s84, %s87
      %p96 = scmp.eq.s32.totalorder %s16, 1
      %p97 = por %p95, %p96
      %p98 = scmp.ne.s32.totalorder %s87, %s88
      %p99 = scmp.eq.s32.totalorder %s16, 0
      %p100 = por %p98, %p99
      %p101 = scmp.ne.s32.totalorder %s87, %s88
      %p102 = scmp.eq.s32.totalorder %s17, 1
      %p103 = por %p101, %p102
      %p105 = scmp.ne.s32.totalorder %s88, %s104
      %p106 = scmp.eq.s32.totalorder %s17, 0
      %p107 = por %p105, %p106
      %s108 = ssub.s32 %s18, %s30
      %p109 = scmp.eq.s32.totalorder %s108, 0
      %s111 = sadd.s32 %s110, 1
      %s112 = scalar_select %p109, %s110, %s111
      %p115 = pneg %p109
      %p116 = scmp.eq.s32.totalorder %s11, 1
      %p117 = por %p115, %p116
      %p118 = scmp.ne.s32.totalorder %s110, %s113
      %p119 = scmp.eq.s32.totalorder %s11, 0
      %p120 = por %p118, %p119
      %p121 = scmp.ne.s32.totalorder %s110, %s113
      %p122 = scmp.eq.s32.totalorder %s16, 1
      %p123 = por %p121, %p122
      %p124 = scmp.ne.s32.totalorder %s113, %s114
      %p125 = scmp.eq.s32.totalorder %s16, 0
      %p126 = por %p124, %p125
      %p127 = scmp.ne.s32.totalorder %s113, %s114
      %p128 = scmp.eq.s32.totalorder %s17, 1
      %p129 = por %p127, %p128
      %p131 = scmp.ne.s32.totalorder %s114, %s130
      %p132 = scmp.eq.s32.totalorder %s17, 0
      %p133 = por %p131, %p132
      %s134 = ssub.s32 %s18, %s30
      %p135 = scmp.eq.s32.totalorder %s134, 0
      %s137 = sadd.s32 %s136, 1
      %s138 = scalar_select %p135, %s136, %s137
      %p141 = pneg %p135
      %p142 = scmp.eq.s32.totalorder %s11, 1
      %p143 = por %p141, %p142
      %p144 = scmp.ne.s32.totalorder %s136, %s139
      %p145 = scmp.eq.s32.totalorder %s11, 0
      %p146 = por %p144, %p145
      %p147 = scmp.ne.s32.totalorder %s136, %s139
      %p148 = scmp.eq.s32.totalorder %s16, 1
      %p149 = por %p147, %p148
      %p150 = scmp.ne.s32.totalorder %s139, %s140
      %p151 = scmp.eq.s32.totalorder %s16, 0
      %p152 = por %p150, %p151
      %p153 = scmp.ne.s32.totalorder %s139, %s140
      %p154 = scmp.eq.s32.totalorder %s17, 1
      %p155 = por %p153, %p154
      %p157 = scmp.ne.s32.totalorder %s140, %s156
      %p158 = scmp.eq.s32.totalorder %s17, 0
      %p159 = por %p157, %p158
      %p160 = scmp.le.s32.totalorder 1, %s11
      %p161 = scmp.lt.s32.totalorder %s11, 3
      %p162 = pnand %p160, %p161
      %p163 = pneg %p162
      // Predicated region
      $region9: #{conv_block_forward.2} parent=5 // pred_check
        _
      $region10: #{conv_block_forward.2} parent=5 // pred_check_branch
        %165 = sbr.rel (%p162) target = $region12
      $region11: #{conv_block_forward.2} parent=5 // pred_region
        %s166 = ssub.s32 %s11, 1
        // Predicated region
        $region13: #{conv_block_forward.2} parent=11 // pred_check
          %p167 = pneg %p72
        $region14: #{conv_block_forward.2} parent=11 // pred_check_branch
          %169 = sbr.rel (%p167) target = $region16
        $region15: #{conv_block_forward.2} parent=11 // pred_region
          _
        $region16: #{conv_block_forward.2} parent=11 // pred_fallthru
          _
      $region12: #{conv_block_forward.2} parent=5 // pred_fallthru
        _
      %p170 = scmp.lt.s32.totalorder %s11, 2
      // Predicated region
      $region17: #{conv_block_forward.2} parent=5 // pred_check
        %p171 = pneg %p170
      $region18: #{conv_block_forward.2} parent=5 // pred_check_branch
        %173 = sbr.rel (%p171) target = $region20
      $region19: #{conv_block_forward.2} parent=5 // pred_region
        // Predicated region
        $region21: #{conv_block_forward.2} parent=19 // pred_check
          %p174 = pneg %p45
        $region22: #{conv_block_forward.2} parent=19 // pred_check_branch
          %176 = sbr.rel (%p174) target = $region24
        $region23: #{conv_block_forward.2} parent=19 // pred_region
          %s177 = sand.u32 %s35, 1
          %s178 = sand.u32 %s35, 1
          %s179 = smul.addr %s178, 40
          %s180 = scalar_lea.vmem [#allocation2], %s179
          %s181 = sadd.s32 %s18, %s19
          %s182 = smul.u32 2, %s181
          %s183 = smul.addr %s182, 4
          %s184 = scalar_lea.vmem %s0, %s183
          // Predicated region
          $region25: #{conv_block_forward.2} parent=23 // pred_check
            _
          $region26: #{conv_block_forward.2} parent=23 // pred_check_branch
            %186 = sbr.rel (0) target = $region28
          $region27: #{conv_block_forward.2} parent=23 // pred_region
            // Predicated region
            $region29: #{conv_block_forward.2} parent=27 // pred_check
              _
            $region30: #{conv_block_forward.2} parent=27 // pred_check_branch
              %188 = sbr.rel (0) target = $region32
            $region31: #{conv_block_forward.2} parent=27 // pred_region
              // Predicated region
              $region44: #{conv_block_forward.2} parent=31 // pred_check
                _
              $region45: #{conv_block_forward.2} parent=31 // pred_check_branch
                %211 = sbr.rel (0) target = $region47
              $region46: #{conv_block_forward.2} parent=31 // pred_region
                loop: start=0, step=1, limit=1
                $region48: #{conv_block_forward.2} parent=46 // loop_pre_header
                  _
                $region49: #{conv_block_forward.2} parent=46 // loop_header
                  %s213 = sphi 0, %s217
                  %p214 = scmp.ge.s32.totalorder %s213, 1
                  %s218 = sphi %s184, %s184
                  %s219 = sphi %s180, %s180
                $region50: #{conv_block_forward.2} parent=46 // loop_header_branch
                  %216 = sbr.rel (%p214) target = $region54
                $region51: #{conv_block_forward.2} parent=46 // loop_body
                  %v220 = vld [vmem:[%s218] sm:$0xff]
                  %221 = vst [vmem:[%s219] sm:$0xff] %v220
                  %v222 = vld [vmem:[%s218 + $0x10] sm:$0xff]
                  %223 = vst [vmem:[%s219 + $0x8] sm:$0xff] %v222
                  %v224 = vld [vmem:[%s218 + $0x20] sm:$0xff]
                  %225 = vst [vmem:[%s219 + $0x10] sm:$0xff] %v224
                  %v226 = vld [vmem:[%s218 + $0x30] sm:$0xff]
                  %227 = vst [vmem:[%s219 + $0x18] sm:$0xff] %v226
                  %v228 = vld [vmem:[%s218 + $0x40] sm:$0xff]
                  %229 = vst [vmem:[%s219 + $0x20] sm:$0xff] %v228
                $region52: #{conv_block_forward.2} parent=46 // loop_footer
                  %s217 = sadd.s32 1, %s213
                $region53: #{conv_block_forward.2} parent=46 // loop_footer_branch
                  %212 = sbr.rel target = $region49
                $region54: #{conv_block_forward.2} parent=46 // loop_exit
                  _
              $region47: #{conv_block_forward.2} parent=31 // pred_fallthru
                _
              // Predicated region
              $region55: #{conv_block_forward.2} parent=31 // pred_check
                _
              $region56: #{conv_block_forward.2} parent=31 // pred_check_branch
                %231 = sbr.rel target = $region58
              $region57: #{conv_block_forward.2} parent=31 // pred_region
                _
              $region58: #{conv_block_forward.2} parent=31 // pred_fallthru
                _
            $region32: #{conv_block_forward.2} parent=27 // pred_fallthru
              _
            // Predicated region
            $region33: #{conv_block_forward.2} parent=27 // pred_check
              _
            $region34: #{conv_block_forward.2} parent=27 // pred_check_branch
              %190 = sbr.rel target = $region36
            $region35: #{conv_block_forward.2} parent=27 // pred_region
              loop: start=0, step=1, limit=1
              $region37: #{conv_block_forward.2} parent=35 // loop_pre_header
                _
              $region38: #{conv_block_forward.2} parent=35 // loop_header
                %s193 = sphi 0, %s197
                %p194 = scmp.ge.s32.totalorder %s193, 1
                %s198 = sphi %s184, %s184
                %s199 = sphi %s180, %s180
              $region39: #{conv_block_forward.2} parent=35 // loop_header_branch
                %196 = sbr.rel (%p194) target = $region43
              $region40: #{conv_block_forward.2} parent=35 // loop_body
                %v200 = vld [vmem:[%s198] sm:$0xff]
                %201 = vst [vmem:[%s199] sm:$0xff] %v200
                %v202 = vld [vmem:[%s198 + $0x10] sm:$0xff]
                %203 = vst [vmem:[%s199 + $0x8] sm:$0xff] %v202
                %v204 = vld [vmem:[%s198 + $0x20] sm:$0xff]
                %205 = vst [vmem:[%s199 + $0x10] sm:$0xff] %v204
                %v206 = vld [vmem:[%s198 + $0x30] sm:$0xff]
                %207 = vst [vmem:[%s199 + $0x18] sm:$0xff] %v206
                %v208 = vld [vmem:[%s198 + $0x40] sm:$0xff]
                %209 = vst [vmem:[%s199 + $0x20] sm:$0xff] %v208
              $region41: #{conv_block_forward.2} parent=35 // loop_footer
                %s197 = sadd.s32 1, %s193
              $region42: #{conv_block_forward.2} parent=35 // loop_footer_branch
                %192 = sbr.rel target = $region38
              $region43: #{conv_block_forward.2} parent=35 // loop_exit
                _
            $region36: #{conv_block_forward.2} parent=27 // pred_fallthru
              _
          $region28: #{conv_block_forward.2} parent=23 // pred_fallthru
            _
          %232 = vnop
        $region24: #{conv_block_forward.2} parent=19 // pred_fallthru
          _
      $region20: #{conv_block_forward.2} parent=5 // pred_fallthru
        _
      %p233 = scmp.le.s32.totalorder 1, %s11
      %p234 = scmp.lt.s32.totalorder %s11, 3
      %p235 = pnand %p233, %p234
      %p236 = pneg %p235
      // Predicated region
      $region59: #{conv_block_forward.2} parent=5 // pred_check
        _
      $region60: #{conv_block_forward.2} parent=5 // pred_check_branch
        %238 = sbr.rel (%p235) target = $region62
      $region61: #{conv_block_forward.2} parent=5 // pred_region
        %s239 = ssub.s32 %s11, 1
        %s240 = sand.u32 %s38, 1
        %s241 = sand.u32 %s38, 1
        %s242 = smul.addr %s241, 40
        %s243 = scalar_lea.vmem [#allocation2], %s242
        // Predicated region
        $region63: #{conv_block_forward.2} parent=61 // pred_check
          %p244 = pneg %p51
        $region64: #{conv_block_forward.2} parent=61 // pred_check_branch
          %246 = sbr.rel (%p244) target = $region66
        $region65: #{conv_block_forward.2} parent=61 // pred_region
          _
        $region66: #{conv_block_forward.2} parent=61 // pred_fallthru
          _
        %s247 = sand.u32 %s38, 1
        %s248 = sand.u32 %s38, 1
        %s249 = smul.addr %s248, 40
        %s250 = scalar_lea.vmem [#allocation2], %s249
        %p251 = pneg %p51
        %p252 = pneg %p48
        %p253 = pneg %p72
        %p254 = pneg %p69
        %p255 = pneg %p100
        %p256 = pneg %p97
        %s257 = sadd.s32 %s20, %s21
        %s258 = smul.u32 2, %s257
        %p259 = scmp.lt.s32.totalorder %s258, 3
        %s260 = scalar_select %p259, %s258, 3
        %s261 = smul.addr %s260, 4
        %s262 = scalar_lea.vmem %s2, %s261
        %p263 = pneg %p126
        %p264 = pneg %p123
        %p265 = scmp.lt.s32.totalorder %s20, 1
        %s266 = scalar_select %p265, %s20, 1
        %s267 = smul.addr %s266, 8
        %s268 = scalar_lea.vmem %s3, %s267
        %p269 = pneg %p152
        %p270 = pneg %p149
        %p271 = scmp.lt.s32.totalorder %s20, 1
        %s272 = scalar_select %p271, %s20, 1
        %s273 = smul.addr %s272, 8
        %s274 = scalar_lea.vmem %s4, %s273
        %s275 = sadd.s32 %s20, %s21
        %s276 = smul.u32 2, %s275
        %s277 = sadd.s32 %s20, %s21
        %s278 = smul.u32 2, %s277
        %p279 = scmp.lt.s32.totalorder %s278, 3
        %s280 = scalar_select %p279, %s278, 3
        %s281 = smul.addr %s280, 4
        %s282 = scalar_lea.vmem %s2, %s281
        %s283 = sadd.s32 %s20, %s21
        %s284 = smul.u32 2, %s283
        %p285 = scmp.lt.s32.totalorder %s20, 1
        %s286 = scalar_select %p285, %s20, 1
        %s287 = smul.addr %s286, 8
        %s288 = scalar_lea.vmem %s3, %s287
        %p289 = scmp.lt.s32.totalorder %s20, 1
        %s290 = scalar_select %p289, %s20, 1
        %s291 = smul.addr %s290, 8
        %s292 = scalar_lea.vmem %s4, %s291
        %p294 = scmp.eq.s32.totalorder %s21, 0
        // Predicated region
        $region67: #{conv_block_forward.2} parent=61 // pred_check
          %p295 = pneg %p294
        $region68: #{conv_block_forward.2} parent=61 // pred_check_branch
          %297 = sbr.rel (%p295) target = $region70
        $region69: #{conv_block_forward.2} parent=61 // pred_region
          %vm298 = vcmask 7168
          %299 = vst.msk [vmem:[%s288] sm:$0xff] %vm298, 0.0
          %300 = vst.msk [vmem:[%s292] sm:$0xff] %vm298, 0.0
        $region70: #{conv_block_forward.2} parent=61 // pred_fallthru
          _
        %v301 = vld [vmem:[%s1] sm:$0xf]
        %v302 = vld [vmem:[%s243] sm:$0xff]
        %v303 = vld [vmem:[%s243 + $0x8] sm:$0xff]
        %v304 = vld [vmem:[%s243 + $0x10] sm:$0xff]
        %v305 = vld [vmem:[%s243 + $0x18] sm:$0xff]
        %v306 = vld [vmem:[%s243 + $0x20] sm:$0x33]
        %v312 = vunpack.c.l.b16 %v302
        %v313 = vunpack.c.h.b16 %v302
        %v314 = vunpack.c.l.b16 %v303
        %v315 = vunpack.c.h.b16 %v303
        %v316 = vunpack.c.l.b16 %v304
        %v317 = vunpack.c.h.b16 %v304
        %v318 = vunpack.c.l.b16 %v305
        %v319 = vunpack.c.h.b16 %v305
        %v320 = vunpack.c.l.b16 %v306
        %v321 = vunpack.c.h.b16 %v306
        %v322 = vpack.c.b16 %v314, %v312
        %v323 = vpack.c.b16 %v315, %v313
        %v324 = vpack.c.b16 %v318, %v316
        %v325 = vpack.c.b16 %v319, %v317
        %v326 = vpack.c.b16 %v320, %v320
        %v327 = vpack.c.b16 %v321, %v321
        %vm332 = vcmask 293888
        %v334 = vsel %vm332, %v301, 0
        %vm336 = vcmask 1041408
        %v338 = vsel %vm336, %v326, 0
        %v341 = vsel %vm336, %v327, 0
        %343 = vmatprep.subr.bf16.mxu0 %v323
        %344 = vmatpush1.bf16.msra.mxu0 %v322
        %345 = vmatprep.subr.bf16.mxu0 %v325
        %346 = vmatpush1.bf16.msra.mxu0 %v324
        %347 = vmatprep.subr.bf16.mxu0 %v341
        %348 = vmatpush1.bf16.msra.mxu0 %v338
        %349 = vmatprep.subr.bf16.mxu0 0
        %350 = vmatpush1.bf16.msra.mxu0 0
        %351 = vmatprep.subr.bf16.mxu0 0
        %352 = vmatpush1.bf16.msra.mxu0 0
        %353 = vmatprep.subr.bf16.mxu0 0
        %354 = vmatpush1.bf16.msra.mxu0 0
        %355 = vmatprep.subr.bf16.mxu0 0
        %356 = vmatpush1.bf16.msra.mxu0 0
        %357 = vmatprep.subr.bf16.mxu0 0
        %358 = vmatpush1.bf16.msra.mxu0 0
        %359 = vmatprep.subr.bf16.mxu0 0
        %360 = vmatpush1.bf16.msra.mxu0 0
        %361 = vmatprep.subr.bf16.mxu0 0
        %362 = vmatpush1.bf16.msra.mxu0 0
        %363 = vmatprep.subr.bf16.mxu0 0
        %364 = vmatpush1.bf16.msra.mxu0 0
        %365 = vmatprep.subr.bf16.mxu0 0
        %366 = vmatpush1.bf16.msra.mxu0 0
        %367 = vmatprep.subr.bf16.mxu0 0
        %368 = vmatpush1.bf16.msra.mxu0 0
        %369 = vmatprep.subr.bf16.mxu0 0
        %370 = vmatpush1.bf16.msra.mxu0 0
        %371 = vmatprep.subr.bf16.mxu0 0
        %372 = vmatpush1.bf16.msra.mxu0 0
        %373 = vmatprep.subr.bf16.mxu0 0
        %374 = vmatpush1.bf16.msra.mxu0 0
        %375 = vmatprep.mubr.bf16.mxu0 0
        %376 = vmatmul.mubr.bf16.gmra.mrb[0].mxu0 %v334
        %v377 = vpop.f32.mrb[0].mxu0
        %v378 = vadd.f32 0.0, %v377
        %v379 = vpop.f32.mrb[0].mxu0
        %v380 = vadd.f32 0.0, %v379
        %v381 = vpop.f32.mrb[0].mxu0
        %v382 = vpop.f32.mrb[0].mxu0
        %383 = vdwg.mxu0
        %v384 = vpack.c.bf16 %v378, %v378
        %v385 = vpack.c.bf16 %v380, %v380
        %v388 = vunpack.c.l.b16 %v384
        %v389 = vunpack.c.l.b16 %v385
        %v390 = vpack.c.b16 %v389, %v388
        %392 = vst [vmem:[%s282] sm:$0xff] %v390
        %v393 = vld [vmem:[%s288] sm:$0xff]
        %v394 = vadd.f32 %v378, %v380
        %395 = vadd.xlane.f32.xlu0 %v394
        %v396 = vpop.xlane.xlu0 %395
        %v397 = vadd.f32 %v393, %v396
        %vm398 = vcmask 7168
        %399 = vst.msk [vmem:[%s288] sm:$0xff] %vm398, %v397
        %v400 = vld [vmem:[%s292] sm:$0xff]
        %v401 = vmul.f32 %v378, %v378
        %v402 = vmul.f32 %v380, %v380
        %v403 = vadd.f32 %v401, %v402
        %404 = vadd.xlane.f32.xlu0 %v403
        %v405 = vpop.xlane.xlu0 %404
        %v406 = vadd.f32 %v400, %v405
        %407 = vst.msk [vmem:[%s292] sm:$0xff] %vm398, %v406
        %s408 = sadd.s32 %s20, %s21
        %s409 = smul.u32 2, %s408
        %p410 = scmp.lt.s32.totalorder %s409, 3
        %s411 = scalar_select %p410, %s409, 3
        %s412 = smul.addr %s411, 4
        %s413 = scalar_lea.vmem %s2, %s412
        %p414 = scmp.lt.s32.totalorder %s20, 1
        %s415 = scalar_select %p414, %s20, 1
        %s416 = smul.addr %s415, 8
        %s417 = scalar_lea.vmem %s3, %s416
        %p418 = scmp.lt.s32.totalorder %s20, 1
        %s419 = scalar_select %p418, %s20, 1
        %s420 = smul.addr %s419, 8
        %s421 = scalar_lea.vmem %s4, %s420
        // Predicated region
        $region71: #{conv_block_forward.2} parent=61 // pred_check
          %p422 = pneg %p97
        $region72: #{conv_block_forward.2} parent=61 // pred_check_branch
          %424 = sbr.rel (%p422) target = $region74
        $region73: #{conv_block_forward.2} parent=61 // pred_region
          %s425 = sadd.s32 %s20, %s21
          %s426 = smul.u32 2, %s425
        $region74: #{conv_block_forward.2} parent=61 // pred_fallthru
          _
        // Predicated region
        $region75: #{conv_block_forward.2} parent=61 // pred_check
          %p427 = pneg %p123
        $region76: #{conv_block_forward.2} parent=61 // pred_check_branch
          %429 = sbr.rel (%p427) target = $region78
        $region77: #{conv_block_forward.2} parent=61 // pred_region
          _
        $region78: #{conv_block_forward.2} parent=61 // pred_fallthru
          _
        // Predicated region
        $region79: #{conv_block_forward.2} parent=61 // pred_check
          %p430 = pneg %p149
        $region80: #{conv_block_forward.2} parent=61 // pred_check_branch
          %432 = sbr.rel (%p430) target = $region82
        $region81: #{conv_block_forward.2} parent=61 // pred_region
          _
        $region82: #{conv_block_forward.2} parent=61 // pred_fallthru
          _
      $region62: #{conv_block_forward.2} parent=5 // pred_fallthru
        _
      %p433 = scmp.le.s32.totalorder 2, %s11
      // Predicated region
      $region83: #{conv_block_forward.2} parent=5 // pred_check
        %p434 = pneg %p433
      $region84: #{conv_block_forward.2} parent=5 // pred_check_branch
        %436 = sbr.rel (%p434) target = $region86
      $region85: #{conv_block_forward.2} parent=5 // pred_region
        %s437 = ssub.s32 %s11, 2
        // Predicated region
        $region87: #{conv_block_forward.2} parent=85 // pred_check
          %p438 = pneg %p103
        $region88: #{conv_block_forward.2} parent=85 // pred_check_branch
          %440 = sbr.rel (%p438) target = $region90
        $region89: #{conv_block_forward.2} parent=85 // pred_region
          %s441 = sadd.s32 %s22, %s23
          %s442 = smul.u32 2, %s441
          %p443 = scmp.lt.s32.totalorder %s442, 3
          %s444 = scalar_select %p443, %s442, 3
          %s445 = smul.addr %s444, 4
          %s446 = scalar_lea.vmem %s2, %s445
        $region90: #{conv_block_forward.2} parent=85 // pred_fallthru
          _
        // Predicated region
        $region91: #{conv_block_forward.2} parent=85 // pred_check
          %p447 = pneg %p129
        $region92: #{conv_block_forward.2} parent=85 // pred_check_branch
          %449 = sbr.rel (%p447) target = $region94
        $region93: #{conv_block_forward.2} parent=85 // pred_region
          %p450 = scmp.lt.s32.totalorder %s22, 1
          %s451 = scalar_select %p450, %s22, 1
          %s452 = smul.addr %s451, 8
          %s453 = scalar_lea.vmem %s3, %s452
        $region94: #{conv_block_forward.2} parent=85 // pred_fallthru
          _
        // Predicated region
        $region95: #{conv_block_forward.2} parent=85 // pred_check
          %p454 = pneg %p155
        $region96: #{conv_block_forward.2} parent=85 // pred_check_branch
          %456 = sbr.rel (%p454) target = $region98
        $region97: #{conv_block_forward.2} parent=85 // pred_region
          %p457 = scmp.lt.s32.totalorder %s22, 1
          %s458 = scalar_select %p457, %s22, 1
          %s459 = smul.addr %s458, 8
          %s460 = scalar_lea.vmem %s4, %s459
        $region98: #{conv_block_forward.2} parent=85 // pred_fallthru
          _
      $region86: #{conv_block_forward.2} parent=5 // pred_fallthru
        _
    $region6: #{conv_block_forward.2} parent=1 // loop_footer
      %s15 = sadd.s32 1, %s11
    $region7: #{conv_block_forward.2} parent=1 // loop_footer_branch
      %10 = sbr.rel target = $region3
    $region8: #{conv_block_forward.2} parent=1 // loop_exit
      _

</llo_original>
